<compile_context>
chip_gen: v7x
topology: tpu7x:2x2x1
jax: 0.10.0
libtpu: 0.0.40
codegen_flags: <defaults>
</compile_context>

<pallas_src>
import jax
import jax.numpy as jnp
from jax.experimental import pallas as pl
from jax.experimental.pallas import tpu as pltpu

EPS = 1e-12  # F.normalize default eps


def _round_up(a, b):
    return (a + b - 1) // b * b


def _disen_kernel_fused(x_ref, wt_ref, b_ref, bmask_ref, out_ref):
    # x_ref:     (TN, inp_dim)    bf16
    # wt_ref:    (inp_dim, hid)   bf16   (W^T)
    # b_ref:     (1, hid)         f32
    # bmask_ref: (hid, hid)       f32    block-diagonal ones (factor membership)
    # out_ref:   (TN, hid)        f32
    y = jnp.dot(x_ref[...], wt_ref[...], preferred_element_type=jnp.float32)
    y = jnp.maximum(y + b_ref[...], 0.0)                                   # relu
    # per-factor sum of squares, broadcast back over hid_dim (lane-dense output)
    ssq = jnp.dot(y * y, bmask_ref[...], preferred_element_type=jnp.float32)
    inv = jax.lax.rsqrt(jnp.maximum(ssq, EPS * EPS))                       # EUP rsqrt
    out_ref[...] = (y * inv).astype(out_ref.dtype)


def _disen_kernel_masked(x_ref, wt_ref, b_ref, mask_ref, maskt_ref, out_ref):
    # Fallback for large hid_dim: two skinny mask matmuls (fewer FLOPs).
    y = jnp.dot(x_ref[...], wt_ref[...], preferred_element_type=jnp.float32)
    y = jnp.maximum(y + b_ref[...], 0.0)
    ssq = jnp.dot(y * y, mask_ref[...], preferred_element_type=jnp.float32)    # (TN, K)
    inv = jax.lax.rsqrt(jnp.maximum(ssq, EPS * EPS))
    scale = jnp.dot(inv, maskt_ref[...], preferred_element_type=jnp.float32)   # (TN, hid)
    out_ref[...] = (y * scale).astype(out_ref.dtype)


def init_disen_forward(x, weight, bias, num_factors, *, tile_n=None, fuse_norm=None):
    """x: (N, inp_dim) f32; weight: (hid_dim, inp_dim); bias: (hid_dim,).

    Returns Z of shape (N, num_factors, hid_dim // num_factors), float32.
    """
    n, inp_dim = x.shape
    hid_dim = weight.shape[0]
    assert hid_dim % num_factors == 0, "hid_dim must be a multiple of num_factors"
    d = hid_dim // num_factors

    # Row tiling: big tiles amortize per-step overhead; multiples of 16 keep the
    # bf16 sublane packing clean; cap at 512 so large N keeps grid length >= 2
    # (two TensorCores to feed on v7x).
    if tile_n is None:
        tile_n = min(512, _round_up(n, 16))
    tile_n = max(16, _round_up(tile_n, 16))
    n_pad = _round_up(n, tile_n)
    x_p = x if n_pad == n else jnp.pad(x, ((0, n_pad - n), (0, 0)))

    # bf16 inputs for the MXU; accumulate + epilogue in f32.
    x_bf = x_p.astype(jnp.bfloat16)
    wt_bf = weight.T.astype(jnp.bfloat16)                      # (inp_dim, hid_dim)
    b2 = bias.reshape(1, hid_dim).astype(jnp.float32)

    if fuse_norm is None:
        fuse_norm = hid_dim <= 512                             # lane-dense crossover

    fac = jnp.arange(hid_dim) // d
    if fuse_norm:
        # B[h, h'] = 1 iff h and h' belong to the same factor (block-diag ones)
        norm_ops = ((fac[:, None] == fac[None, :]).astype(jnp.float32),)
        norm_specs = [pl.BlockSpec((hid_dim, hid_dim), lambda i: (0, 0))]
        kernel = _disen_kernel_fused
    else:
        mask = (fac[:, None] == jnp.arange(num_factors)[None, :]).astype(jnp.float32)
        norm_ops = (mask, mask.T)
        norm_specs = [
            pl.BlockSpec((hid_dim, num_factors), lambda i: (0, 0)),
            pl.BlockSpec((num_factors, hid_dim), lambda i: (0, 0)),
        ]
        kernel = _disen_kernel_masked

    # VMEM budget: resident constants + double-buffered x/out tiles (+ slack),
    # clamped to 64 MiB so it is valid on v7x as well as v5e/v6e.
    const_bytes = wt_bf.size * 2 + b2.size * 4 + sum(int(m.size) * 4 for m in norm_ops)
    stream_bytes = tile_n * inp_dim * 2 + tile_n * hid_dim * 4
    vmem_limit = int(min(64 << 20, max(32 << 20, 2 * (2 * const_bytes + 2 * stream_bytes))))

    grid = (n_pad // tile_n,)
    out = pl.pallas_call(
        kernel,
        out_shape=jax.ShapeDtypeStruct((n_pad, hid_dim), jnp.float32),
        grid_spec=pltpu.PrefetchScalarGridSpec(
            num_scalar_prefetch=0,
            grid=grid,
            in_specs=[
                pl.BlockSpec((tile_n, inp_dim), lambda i: (i, 0)),
                pl.BlockSpec((inp_dim, hid_dim), lambda i: (0, 0)),
                pl.BlockSpec((1, hid_dim), lambda i: (0, 0)),
            ] + norm_specs,
            out_specs=pl.BlockSpec((tile_n, hid_dim), lambda i: (i, 0)),
        ),
        compiler_params=pltpu.CompilerParams(
            dimension_semantics=("parallel",),
            vmem_limit_bytes=vmem_limit,
        ),
    )(x_bf, wt_bf, b2, *norm_ops)

    return out[:n].reshape(n, num_factors, d)


def _reference(x, weight, bias, num_factors):
    """Pure-JAX f32 reference matching the PyTorch module."""
    hid_dim = weight.shape[0]
    d = hid_dim // num_factors
    z = x @ weight.T + bias
    z = jnp.maximum(z, 0.0).reshape(-1, num_factors, d)
    norm = jnp.sqrt(jnp.sum(z * z, axis=2, keepdims=True))
    return z / jnp.maximum(norm, EPS)


if __name__ == "__main__":
    # small shapes consistent with the module
    N = 8            # number of nodes / rows (flattened batch)
    inp_dim = 16
    hid_dim = 32
    num_factors = 4  # hid_dim // num_factors * num_factors == 32

    key = jax.random.PRNGKey(0)
    kx, kw = jax.random.split(key)

    x = jax.random.normal(kx, (N, inp_dim), dtype=jnp.float32)

    # deterministic parameter init: xavier_uniform_ for weight, zeros for bias
    bound = (6.0 / (inp_dim + hid_dim)) ** 0.5
    weight = jax.random.uniform(kw, (hid_dim, inp_dim), dtype=jnp.float32,
                                minval=-bound, maxval=bound)
    bias = jnp.zeros((hid_dim,), dtype=jnp.float32)

    z_ref = _reference(x, weight, bias, num_factors)

    # fused (lane-dense) normalization path -- the default for this hid_dim
    z = jax.block_until_ready(init_disen_forward(x, weight, bias, num_factors))
    assert z.shape == (N, num_factors, hid_dim // num_factors)
    # bf16 MXU inputs -> relaxed tolerance vs the f32 reference
    assert jnp.allclose(z, z_ref, atol=2e-2, rtol=2e-2), "fused path mismatch vs reference"

    # two-mask-matmul fallback (large hid_dim path), exercised here for coverage
    z2 = jax.block_until_ready(
        init_disen_forward(x, weight, bias, num_factors, fuse_norm=False))
    assert jnp.allclose(z2, z_ref, atol=2e-2, rtol=2e-2), "masked path mismatch vs reference"

    print("KERNEL_OK")
</pallas_src>

<mosaic_0001>
module attributes {stable_mosaic.version = 11 : i64} {
  func.func @_disen_kernel_fused(%arg0: i32, %arg1: memref<16x16xbf16, #tpu.memory_space<vmem>>, %arg2: memref<16x32xbf16, #tpu.memory_space<vmem>>, %arg3: memref<1x32xf32, #tpu.memory_space<vmem>>, %arg4: memref<32x32xf32, #tpu.memory_space<vmem>>, %arg5: memref<16x32xf32, #tpu.memory_space<vmem>>) attributes {dimension_semantics = [#tpu.dimension_semantics<parallel>], iteration_bounds = array<i64: 1>, scalar_prefetch = 0 : i64, scratch_operands = 0 : i64, tpu.core_type = #tpu.core_type<tc>, window_params = [{transform_indices = @transform_0, window_bounds = array<i64: 16, 16>}, {pipeline_mode = #tpu.pipeline_mode<synchronous>, transform_indices = @transform_1, window_bounds = array<i64: 16, 32>}, {pipeline_mode = #tpu.pipeline_mode<synchronous>, transform_indices = @transform_2, window_bounds = array<i64: 1, 32>}, {pipeline_mode = #tpu.pipeline_mode<synchronous>, transform_indices = @transform_3, window_bounds = array<i64: 32, 32>}, {transform_indices = @transform_4, window_bounds = array<i64: 16, 32>}]} {
    %c0 = arith.constant 0 : index
    %c0_0 = arith.constant 0 : index
    %0 = vector.load %arg1[%c0, %c0_0] : memref<16x16xbf16, #tpu.memory_space<vmem>>, vector<16x16xbf16>
    %c0_1 = arith.constant 0 : index
    %c0_2 = arith.constant 0 : index
    %1 = vector.load %arg2[%c0_1, %c0_2] : memref<16x32xbf16, #tpu.memory_space<vmem>>, vector<16x32xbf16>
    %cst = arith.constant dense<0.000000e+00> : vector<16x32xf32>
    %2 = tpu.matmul %0, %1, %cst {dimension_numbers = #tpu.dot_dimension_numbers<[1], [0], [0], [1], [0, 0, 1, 1], [], []>} : vector<16x16xbf16>, vector<16x32xbf16>, vector<16x32xf32> -> vector<16x32xf32>
    %c0_3 = arith.constant 0 : index
    %c0_4 = arith.constant 0 : index
    %3 = vector.load %arg3[%c0_3, %c0_4] : memref<1x32xf32, #tpu.memory_space<vmem>>, vector<1x32xf32>
    %4 = vector.broadcast %3 : vector<1x32xf32> to vector<16x32xf32>
    %5 = arith.addf %2, %4 : vector<16x32xf32>
    %cst_5 = arith.constant 0.000000e+00 : f32
    %6 = vector.broadcast %cst_5 : f32 to vector<16x32xf32>
    %7 = arith.maximumf %5, %6 : vector<16x32xf32>
    %8 = arith.mulf %7, %7 : vector<16x32xf32>
    %c0_6 = arith.constant 0 : index
    %c0_7 = arith.constant 0 : index
    %9 = vector.load %arg4[%c0_6, %c0_7] : memref<32x32xf32, #tpu.memory_space<vmem>>, vector<32x32xf32>
    %cst_8 = arith.constant dense<0.000000e+00> : vector<16x32xf32>
    %10 = tpu.matmul %8, %9, %cst_8 {dimension_numbers = #tpu.dot_dimension_numbers<[1], [0], [0], [1], [0, 0, 1, 1], [], []>} : vector<16x32xf32>, vector<32x32xf32>, vector<16x32xf32> -> vector<16x32xf32>
    %cst_9 = arith.constant 1.000000e-24 : f32
    %11 = vector.broadcast %cst_9 : f32 to vector<16x32xf32>
    %12 = arith.maximumf %10, %11 : vector<16x32xf32>
    %13 = math.rsqrt %12 : vector<16x32xf32>
    %14 = arith.mulf %7, %13 : vector<16x32xf32>
    %c0_10 = arith.constant 0 : index
    %c0_11 = arith.constant 0 : index
    %15 = vector.load %arg5[%c0_10, %c0_11] : memref<16x32xf32, #tpu.memory_space<vmem>>, vector<16x32xf32>
    tpu.vector_store %arg5[%c0_10, %c0_11], %14 {strides = array<i32>} : memref<16x32xf32, #tpu.memory_space<vmem>>, vector<16x32xf32>,
    return
  }
  func.func @transform_0(%arg0: i32) -> (i32, i32) {
    %c0_i32 = arith.constant 0 : i32
    %c0_i32_0 = arith.constant 0 : i32
    return %arg0, %c0_i32 : i32, i32
  }
  func.func @transform_1(%arg0: i32) -> (i32, i32) {
    %c0_i32 = arith.constant 0 : i32
    %c0_i32_0 = arith.constant 0 : i32
    %c0_i32_1 = arith.constant 0 : i32
    return %c0_i32, %c0_i32_0 : i32, i32
  }
  func.func @transform_2(%arg0: i32) -> (i32, i32) {
    %c0_i32 = arith.constant 0 : i32
    %c0_i32_0 = arith.constant 0 : i32
    %c0_i32_1 = arith.constant 0 : i32
    return %c0_i32, %c0_i32_0 : i32, i32
  }
  func.func @transform_3(%arg0: i32) -> (i32, i32) {
    %c0_i32 = arith.constant 0 : i32
    %c0_i32_0 = arith.constant 0 : i32
    %c0_i32_1 = arith.constant 0 : i32
    return %c0_i32, %c0_i32_0 : i32, i32
  }
  func.func @transform_4(%arg0: i32) -> (i32, i32) {
    %c0_i32 = arith.constant 0 : i32
    %c0_i32_0 = arith.constant 0 : i32
    return %arg0, %c0_i32 : i32, i32
  }
}

</mosaic_0001>

<llo_original>
// kernel: tpu_custom_call.1
$region0: #{tpu_custom_call.1}
  #allocation0 [shape = 'u32[]', space=smem, size = 0x4, offset = 0x4, fixed_abs, tag = 'smem constant byte address 0x4 - core index']
  #allocation1 [shape = 'u32[144,128]{1,0:T(1,128)}', space=vmem, size = 0x12000, scoped, tag = 'internal scratch']
  %s0 = inlined_call_operand.hbm [shape: bf16[16,16], index: 0, kind: input, shape index: {}]
  %s1 = inlined_call_operand.hbm [shape: bf16[16,32], index: 1, kind: input, shape index: {}]
  %s2 = inlined_call_operand.vmem [shape: f32[1,32], index: 2, kind: input, shape index: {}]
  %s3 = inlined_call_operand.hbm [shape: f32[32,32], index: 3, kind: input, shape index: {}]
  %s4 = inlined_call_operand.hbm [shape: f32[16,32], index: 4, kind: output, shape index: {}]
  %s5 = sld [smem:[#allocation0]]
  $region38: #{tpu_custom_call.1} parent=0
    _
  %s7 = ssub.s32 1, %s5
  %s8 = scalar_select 0, %s7, %s5
  $region1: #{tpu_custom_call.1} parent=0
    #allocation2 [shape = 'u8[4096]{0}', space=vmem, size = 0x1000, scoped, tag = 'input window, operand 0, single buffered']
    #allocation3 [shape = 's32[1]{0}', space=sflag, size = 0x4, scoped, tag = 'scoped memory for tpu_custom_call.1']
    #allocation4 [shape = 's32[1]{0}', space=sflag, size = 0x4, scoped, tag = 'scoped memory for tpu_custom_call.1']
    #allocation5 [shape = 'u8[4096]{0}', space=vmem, size = 0x1000, scoped, tag = 'input window, operand 1, single buffered']
    #allocation6 [shape = 's32[1]{0}', space=sflag, size = 0x4, scoped, tag = 'scoped memory for tpu_custom_call.1']
    #allocation7 [shape = 'u8[16384]{0}', space=vmem, size = 0x4000, scoped, tag = 'input window, operand 3, single buffered']
    #allocation8 [shape = 'u8[8192]{0}', space=vmem, size = 0x2000, scoped, tag = 'output window, operand 0, single buffered']
    %9 = vsyncpa [#allocation3], 0
    %10 = vsyncpa [#allocation6], 0
    %11 = vsyncpa [#allocation4], 0
    // Predicated region
    $region2: #{tpu_custom_call.1} parent=1 // pred_check
      _
    $region3: #{tpu_custom_call.1} parent=1 // pred_check_branch
      %13 = sbr.rel (0) target = $region5
    $region4: #{tpu_custom_call.1} parent=1 // pred_region
      %s15 = ssub.s32 128, 128
      %16 = vsyncadd [#allocation3], %s15
      %s17 = sshll.u32 [#allocation2], 4
      %s18 = int_to_ptr.vmem [resolvable:$true] %s17
      %23 = dma.hbm_to_vmem [thread:$0]  %s0, 128, %s18, [#allocation3], 64, 64, 4
    $region5: #{tpu_custom_call.1} parent=1 // pred_fallthru
      _
    // Predicated region
    $region6: #{tpu_custom_call.1} parent=1 // pred_check
      _
    $region7: #{tpu_custom_call.1} parent=1 // pred_check_branch
      %25 = sbr.rel (0) target = $region9
    $region8: #{tpu_custom_call.1} parent=1 // pred_region
      %s27 = ssub.s32 128, 128
      %28 = vsyncadd [#allocation6], %s27
      %s29 = sshll.u32 [#allocation5], 4
      %s30 = int_to_ptr.vmem [resolvable:$true] %s29
      %35 = dma.hbm_to_vmem [thread:$0]  %s1, 128, %s30, [#allocation6], 64, 64, 4
    $region9: #{tpu_custom_call.1} parent=1 // pred_fallthru
      _
    // Predicated region
    $region10: #{tpu_custom_call.1} parent=1 // pred_check
      _
    $region11: #{tpu_custom_call.1} parent=1 // pred_check_branch
      %37 = sbr.rel (0) target = $region13
    $region12: #{tpu_custom_call.1} parent=1 // pred_region
      _
    $region13: #{tpu_custom_call.1} parent=1 // pred_fallthru
      _
    // Predicated region
    $region14: #{tpu_custom_call.1} parent=1 // pred_check
      _
    $region15: #{tpu_custom_call.1} parent=1 // pred_check_branch
      %39 = sbr.rel (0) target = $region17
    $region16: #{tpu_custom_call.1} parent=1 // pred_region
      %s41 = ssub.s32 512, 512
      %42 = vsyncadd [#allocation6], %s41
      %s43 = sshll.u32 [#allocation7], 4
      %s44 = int_to_ptr.vmem [resolvable:$true] %s43
      %49 = dma.hbm_to_vmem [thread:$0]  %s3, 512, %s44, [#allocation6], 128, 128, 8
    $region17: #{tpu_custom_call.1} parent=1 // pred_fallthru
      _
    // Predicated region
    $region18: #{tpu_custom_call.1} parent=1 // pred_check
      _
    $region19: #{tpu_custom_call.1} parent=1 // pred_check_branch
      %51 = sbr.rel (0) target = $region21
    $region20: #{tpu_custom_call.1} parent=1 // pred_region
      %52 = dma.done [#allocation3], 128
    $region21: #{tpu_custom_call.1} parent=1 // pred_fallthru
      _
    // Predicated region
    $region22: #{tpu_custom_call.1} parent=1 // pred_check
      _
    $region23: #{tpu_custom_call.1} parent=1 // pred_check_branch
      %54 = sbr.rel (0) target = $region25
    $region24: #{tpu_custom_call.1} parent=1 // pred_region
      %55 = dma.done [#allocation6], 128
    $region25: #{tpu_custom_call.1} parent=1 // pred_fallthru
      _
    // Predicated region
    $region26: #{tpu_custom_call.1} parent=1 // pred_check
      _
    $region27: #{tpu_custom_call.1} parent=1 // pred_check_branch
      %57 = sbr.rel (0) target = $region29
    $region28: #{tpu_custom_call.1} parent=1 // pred_region
      %58 = dma.done [#allocation6], 512
    $region29: #{tpu_custom_call.1} parent=1 // pred_fallthru
      _
    %v60 = vld [vmem:[#allocation2] sm:$0xf]
    %v61 = vld [vmem:[#allocation2 + $0x4] sm:$0xf]
    %v62 = vld [vmem:[#allocation5] sm:$0xf]
    %v63 = vld [vmem:[#allocation5 + $0x4] sm:$0xf]
    %v64 = vld [vmem:[%s2] sm:$0x1]
    %v66 = vlaneseq
    %v67 = vshrl.u32 %v66, 7
    %v68 = vsub.s32 0, %v67
    %v69 = vrot.slane %v64, %v68
    %v73 = vunpack.c.l.b16 %v60
    %v74 = vunpack.c.l.b16 %v61
    %v75 = vpack.c.b16 %v74, %v73
    %v78 = vunpack.c.l.b16 %v62
    %v79 = vunpack.c.l.b16 %v63
    %v80 = vpack.c.b16 %v79, %v78
    %vm82 = vcmask 130048
    %v84 = vsel %vm82, %v75, 0
    %86 = vmatprep.subr.bf16.mxu0 0
    %87 = vmatpush1.bf16.msra.mxu0 %v80
    %88 = vmatprep.subr.bf16.mxu0 0
    %89 = vmatpush1.bf16.msra.mxu0 0
    %90 = vmatprep.subr.bf16.mxu0 0
    %91 = vmatpush1.bf16.msra.mxu0 0
    %92 = vmatprep.subr.bf16.mxu0 0
    %93 = vmatpush1.bf16.msra.mxu0 0
    %94 = vmatprep.subr.bf16.mxu0 0
    %95 = vmatpush1.bf16.msra.mxu0 0
    %96 = vmatprep.subr.bf16.mxu0 0
    %97 = vmatpush1.bf16.msra.mxu0 0
    %98 = vmatprep.subr.bf16.mxu0 0
    %99 = vmatpush1.bf16.msra.mxu0 0
    %100 = vmatprep.subr.bf16.mxu0 0
    %101 = vmatpush1.bf16.msra.mxu0 0
    %102 = vmatprep.subr.bf16.mxu0 0
    %103 = vmatpush1.bf16.msra.mxu0 0
    %104 = vmatprep.subr.bf16.mxu0 0
    %105 = vmatpush1.bf16.msra.mxu0 0
    %106 = vmatprep.subr.bf16.mxu0 0
    %107 = vmatpush1.bf16.msra.mxu0 0
    %108 = vmatprep.subr.bf16.mxu0 0
    %109 = vmatpush1.bf16.msra.mxu0 0
    %110 = vmatprep.subr.bf16.mxu0 0
    %111 = vmatpush1.bf16.msra.mxu0 0
    %112 = vmatprep.subr.bf16.mxu0 0
    %113 = vmatpush1.bf16.msra.mxu0 0
    %114 = vmatprep.subr.bf16.mxu0 0
    %115 = vmatpush1.bf16.msra.mxu0 0
    %116 = vmatprep.subr.bf16.mxu0 0
    %117 = vmatpush1.bf16.msra.mxu0 0
    %118 = vmatprep.mubr.bf16.mxu0 0
    %119 = vmatmul.mubr.bf16.gmra.mrb[0].mxu0 %v84
    %v120 = vpop.f32.mrb[0].mxu0
    %v121 = vadd.f32 %v69, %v120
    %v122 = vpop.f32.mrb[0].mxu0
    %v123 = vpop.f32.mrb[0].mxu0
    %v124 = vadd.f32 %v69, %v123
    %v125 = vpop.f32.mrb[0].mxu0
    %126 = vdwg.mxu0
    %v127 = vmax.f32 %v121, 0.0
    %v128 = vmax.f32 %v124, 0.0
    %v129 = vmul.f32 %v127, %v127
    %v130 = vmul.f32 %v128, %v128
    %v131 = vld [vmem:[#allocation7] sm:$0xff]
    %v132 = vld [vmem:[#allocation7 + $0x8] sm:$0xff]
    %v133 = vld [vmem:[#allocation7 + $0x10] sm:$0xff]
    %v134 = vld [vmem:[#allocation7 + $0x18] sm:$0xff]
    %vm135 = vcmask 261120
    %v137 = vsel %vm135, %v129, 0
    %v140 = vsel %vm135, %v130, 0
    %142 = vmatprep.subr.mxu0 0.0
    %143 = vmatpush1.msra.mxu0 %v131
    %144 = vmatprep.subr.mxu0 0.0
    %145 = vmatpush1.msra.mxu0 %v132
    %146 = vmatprep.subr.mxu0 0.0
    %147 = vmatpush1.msra.mxu0 %v133
    %148 = vmatprep.subr.mxu0 0.0
    %149 = vmatpush1.msra.mxu0 %v134
    %150 = vmatprep.subr.mxu0 0.0
    %151 = vmatpush1.msra.mxu0 0.0
    %152 = vmatprep.subr.mxu0 0.0
    %153 = vmatpush1.msra.mxu0 0.0
    %154 = vmatprep.subr.mxu0 0.0
    %155 = vmatpush1.msra.mxu0 0.0
    %156 = vmatprep.subr.mxu0 0.0
    %157 = vmatpush1.msra.mxu0 0.0
    %158 = vmatprep.subr.mxu0 0.0
    %159 = vmatpush1.msra.mxu0 0.0
    %160 = vmatprep.subr.mxu0 0.0
    %161 = vmatpush1.msra.mxu0 0.0
    %162 = vmatprep.subr.mxu0 0.0
    %163 = vmatpush1.msra.mxu0 0.0
    %164 = vmatprep.subr.mxu0 0.0
    %165 = vmatpush1.msra.mxu0 0.0
    %166 = vmatprep.subr.mxu0 0.0
    %167 = vmatpush1.msra.mxu0 0.0
    %168 = vmatprep.subr.mxu0 0.0
    %169 = vmatpush1.msra.mxu0 0.0
    %170 = vmatprep.subr.mxu0 0.0
    %171 = vmatpush1.msra.mxu0 0.0
    %172 = vmatprep.subr.mxu0 0.0
    %173 = vmatpush1.msra.mxu0 0.0
    %174 = vmatprep.subr.mxu0 0.0
    %175 = vmatpush1.msra.mxu0 0.0
    %176 = vmatprep.subr.mxu0 0.0
    %177 = vmatpush1.msra.mxu0 0.0
    %178 = vmatprep.subr.mxu0 0.0
    %179 = vmatpush1.msra.mxu0 0.0
    %180 = vmatprep.subr.mxu0 0.0
    %181 = vmatpush1.msra.mxu0 0.0
    %182 = vmatprep.subr.mxu0 0.0
    %183 = vmatpush1.msra.mxu0 0.0
    %184 = vmatprep.subr.mxu0 0.0
    %185 = vmatpush1.msra.mxu0 0.0
    %186 = vmatprep.subr.mxu0 0.0
    %187 = vmatpush1.msra.mxu0 0.0
    %188 = vmatprep.subr.mxu0 0.0
    %189 = vmatpush1.msra.mxu0 0.0
    %190 = vmatprep.subr.mxu0 0.0
    %191 = vmatpush1.msra.mxu0 0.0
    %192 = vmatprep.subr.mxu0 0.0
    %193 = vmatpush1.msra.mxu0 0.0
    %194 = vmatprep.subr.mxu0 0.0
    %195 = vmatpush1.msra.mxu0 0.0
    %196 = vmatprep.subr.mxu0 0.0
    %197 = vmatpush1.msra.mxu0 0.0
    %198 = vmatprep.subr.mxu0 0.0
    %199 = vmatpush1.msra.mxu0 0.0
    %200 = vmatprep.subr.mxu0 0.0
    %201 = vmatpush1.msra.mxu0 0.0
    %202 = vmatprep.subr.mxu0 0.0
    %203 = vmatpush1.msra.mxu0 0.0
    %204 = vmatprep.subr.mxu0 0.0
    %205 = vmatpush1.msra.mxu0 0.0
    %206 = vmatprep.mubr.f32.mxu0 0.0
    %207 = vmatmul.mubr.f32.gmra.mrb[0].mxu0 %v137
    %v208 = vpop.f32.mrb[0].mxu0
    %v209 = vadd.f32 0.0, %v208
    %v210 = vpop.f32.mrb[0].mxu0
    %211 = vmatprep.mubr.f32.mxu0 0.0
    %212 = vmatmul.mubr.f32.gmra.mrb[0].mxu0 %v140
    %v213 = vpop.f32.mrb[0].mxu0
    %v214 = vadd.f32 0.0, %v213
    %v215 = vpop.f32.mrb[0].mxu0
    %216 = vdwg.mxu0
    %v217 = vmax.f32 %v209, 1e-24
    %v218 = vmax.f32 %v214, 1e-24
    %v219 = vrsqrt.pop %v217
    %v220 = vrsqrt.pop %v218
    %v221 = vmul.f32 %v127, %v219
    %v222 = vmul.f32 %v128, %v220
    %223 = vst.msk [vmem:[#allocation8] sm:$0xff] %vm135, %v221
    %224 = vst.msk [vmem:[#allocation8 + $0x8] sm:$0xff] %vm135, %v222
    // Predicated region
    $region30: #{tpu_custom_call.1} parent=1 // pred_check
      _
    $region31: #{tpu_custom_call.1} parent=1 // pred_check_branch
      %226 = sbr.rel (0) target = $region33
    $region32: #{tpu_custom_call.1} parent=1 // pred_region
      %s228 = ssub.s32 256, 256
      %229 = vsyncadd [#allocation4], %s228
      %s230 = sshll.u32 [#allocation8], 4
      %s231 = int_to_ptr.vmem [resolvable:$true] %s230
      %236 = dma.vmem_to_hbm [thread:$0]  %s231, 256, %s4, [#allocation4], 128, 128, 8
    $region33: #{tpu_custom_call.1} parent=1 // pred_fallthru
      _
    // Predicated region
    $region34: #{tpu_custom_call.1} parent=1 // pred_check
      _
    $region35: #{tpu_custom_call.1} parent=1 // pred_check_branch
      %238 = sbr.rel (0) target = $region37
    $region36: #{tpu_custom_call.1} parent=1 // pred_region
      %239 = dma.done [#allocation4], 256
    $region37: #{tpu_custom_call.1} parent=1 // pred_fallthru
      _
    %240 = vsyncpa [#allocation3], 1
    %241 = vsyncpa [#allocation6], 1
    %242 = vsyncpa [#allocation4], 1

</llo_original>
